<compile_context>
chip_gen: v5e
topology: v5e:2x2
jax: 0.10.0
libtpu: 0.0.40
codegen_flags: <defaults>
</compile_context>

<pallas_src>
import jax
import jax.numpy as jnp
from jax import lax
from jax.experimental import pallas as pl
from jax.experimental.pallas import tpu as pltpu


# ----------------------------------------------------------------------------
# Generation-aware tiling / compiler-param helpers
# ----------------------------------------------------------------------------
_CFG = None


def _tpu_cfg():
    """Pick VMEM budget and tile targets based on the part's VMEM capacity."""
    global _CFG
    if _CFG is None:
        vmem_bytes = 64 * 1024 * 1024            # conservative default (v7x)
        try:
            vmem_bytes = int(pltpu.get_tpu_info().vmem_capacity_bytes)
        except Exception:
            pass
        if vmem_bytes >= 128 * 1024 * 1024:      # v5e / v6e: 128 MiB VMEM
            _CFG = dict(vmem_limit=100 * 1024 * 1024, node_tile=512,
                        src_tile=1024, attn_temp_budget=48 * 1024 * 1024)
        else:                                    # v7x: 64 MiB VMEM / TC
            _CFG = dict(vmem_limit=48 * 1024 * 1024, node_tile=256,
                        src_tile=512, attn_temp_budget=20 * 1024 * 1024)
    return _CFG


def _pick_tile(dim, target, quantum):
    """Largest tile <= target that divides dim and is a multiple of quantum,
    falling back to the full dim (always a legal block)."""
    if dim <= target:
        return dim
    t = (target // quantum) * quantum
    while t >= quantum:
        if dim % t == 0:
            return t
        t -= quantum
    return dim


def _cparams(dims):
    return pltpu.CompilerParams(dimension_semantics=dims,
                                vmem_limit_bytes=_tpu_cfg()["vmem_limit"])


# ----------------------------------------------------------------------------
# Kernels
# ----------------------------------------------------------------------------
def make_lin_stats_kernel(n_in):
    """Pass 1 of temp_layer / project_Y: h = sum_i x_i @ w_i + b (bf16 out),
    plus PER-TILE partial sum / sum-of-squares (parallel / megacore-friendly)."""

    def kernel(*refs):
        xs = refs[:n_in]
        ws = refs[n_in:2 * n_in]
        b_ref = refs[2 * n_in]
        h_ref, s1_ref, s2_ref = refs[2 * n_in + 1:]

        h = jnp.dot(xs[0][...].astype(jnp.bfloat16), ws[0][...],
                    preferred_element_type=jnp.float32)
        for t in range(1, n_in):
            h = h + jnp.dot(xs[t][...].astype(jnp.bfloat16), ws[t][...],
                            preferred_element_type=jnp.float32)
        h = h + b_ref[...]
        h_ref[...] = h.astype(h_ref.dtype)
        s1_ref[...] = jnp.sum(h, axis=0, keepdims=True)
        s2_ref[...] = jnp.sum(h * h, axis=0, keepdims=True)

    return kernel


def make_mlp_bn_kernel(n_total):
    """Pass 2 of temp_layer: BN(batch stats, affine) -> [Dropout] -> Linear -> ReLU."""
    inv_n = 1.0 / float(n_total)

    def kernel(h_ref, s1_ref, s2_ref, gamma_ref, beta_ref, w2_ref, b2_ref, o_ref):
        s1 = jnp.sum(s1_ref[...], axis=0, keepdims=True)
        s2 = jnp.sum(s2_ref[...], axis=0, keepdims=True)
        mean = s1 * inv_n
        var = jnp.maximum(s2 * inv_n - mean * mean, 0.0)   # biased (torch BN)
        h = h_ref[...].astype(jnp.float32)
        hn = (h - mean) * lax.rsqrt(var + 1e-5)
        hn = hn * gamma_ref[...] + beta_ref[...]
        # TODO(synk): Dropout between BN and the second Linear skipped (inference).
        out = jnp.dot(hn.astype(jnp.bfloat16), w2_ref[...],
                      preferred_element_type=jnp.float32) + b2_ref[...]
        o_ref[...] = jnp.maximum(out, 0.0)

    return kernel


def make_projy_bn_kernel(n_total):
    """Pass 2 of project_Y: BN(no affine) -> LeakyReLU(0.01) -> Linear, + log_softmax."""
    inv_n = 1.0 / float(n_total)

    def kernel(h_ref, s1_ref, s2_ref, w2_ref, b2_ref, logits_ref, logp_ref):
        s1 = jnp.sum(s1_ref[...], axis=0, keepdims=True)
        s2 = jnp.sum(s2_ref[...], axis=0, keepdims=True)
        mean = s1 * inv_n
        var = jnp.maximum(s2 * inv_n - mean * mean, 0.0)
        h = h_ref[...].astype(jnp.float32)
        hn = (h - mean) * lax.rsqrt(var + 1e-5)
        hn = jnp.where(hn > 0, hn, 0.01 * hn)
        logits = jnp.dot(hn.astype(jnp.bfloat16), w2_ref[...],
                         preferred_element_type=jnp.float32) + b2_ref[...]
        logits_ref[...] = logits
        m = jnp.max(logits, axis=-1, keepdims=True)
        lse = m + jnp.log(jnp.sum(jnp.exp(logits - m), axis=-1, keepdims=True))
        logp_ref[...] = logits - lse

    return kernel


def lin2_kernel(x1_ref, x2_ref, wa_ref, wb_ref, b_ref, o_ref):
    """Linear over concat(x1, x2) with the weight split at param-prep time."""
    o_ref[...] = (jnp.dot(x1_ref[...].astype(jnp.bfloat16), wa_ref[...],
                          preferred_element_type=jnp.float32)
                  + jnp.dot(x2_ref[...].astype(jnp.bfloat16), wb_ref[...],
                            preferred_element_type=jnp.float32)
                  + b_ref[...])


def make_gat_src_kernel(heads, dph):
    """Fused source-side prep for GATConv: xt = x_src @ W_lin laid out as
    [heads, Ts, dph] (bf16) and per-head source attention logits [heads, Ts]."""

    def kernel(x_ref, wlin_ref, ssrc_ref, xt_ref, asrc_ref):
        xt = jnp.dot(x_ref[...].astype(jnp.bfloat16), wlin_ref[...],
                     preferred_element_type=jnp.float32)              # [Ts, hd]
        ts = xt.shape[0]
        xt_h = jnp.transpose(xt.reshape(ts, heads, dph), (1, 0, 2))   # [heads, Ts, dph]
        xt_ref[...] = xt_h.astype(jnp.bfloat16)
        asrc_ref[...] = jnp.sum(xt_h * ssrc_ref[...][:, None, :], axis=-1)

    return kernel


def make_gat_attn_kernel(heads, dph, transpose_mv):
    """Dense-bipartite GATConv (edge_dim=1, add_self_loops=False, concat=True)
    with flash-style online softmax over source tiles.

    Grid: (dst tiles [parallel], src tiles [arbitrary]).
    mv tile carries both the edge mask (sentinel-encoded, bf16) and the value.
    All per-head math is batched over the heads axis; the head-major
    accumulator is reshaped once at finalize for a single lane-dense store.
    """
    hd = heads * dph

    def kernel(mv_ref, xs_ref, asrc_ref, xd_ref, wlin_ref, sdst_ref, c1_ref,
               bias_ref, o_ref, adst_scr, m_scr, l_scr, acc_scr):
        k = pl.program_id(1)
        nk = pl.num_programs(1)

        @pl.when(k == 0)
        def _init():
            xd_t = jnp.dot(xd_ref[...].astype(jnp.bfloat16), wlin_ref[...],
                           preferred_element_type=jnp.float32)         # [Td, hd]
            td = xd_t.shape[0]
            xd_h = jnp.transpose(xd_t.reshape(td, heads, dph), (1, 0, 2))
            adst_scr[...] = jnp.sum(xd_h * sdst_ref[...][:, None, :], axis=-1)
            m_scr[...] = jnp.full_like(m_scr, -1e30)
            l_scr[...] = jnp.zeros_like(l_scr)
            acc_scr[...] = jnp.zeros_like(acc_scr)

        mv = mv_ref[...]
        if transpose_mv:
            mv = mv.T                                     # per-tile XLU transpose
        mv = mv.astype(jnp.float32)                       # [Td, Ts]
        mask = mv > -1e8                                  # sentinel-derived mask

        # batched-over-heads attention logits: [heads, Td, Ts]
        logit = (adst_scr[...][:, :, None] + asrc_ref[...][:, None, :]
                 + mv[None, :, :] * c1_ref[...][:, :, None])
        logit = jnp.where(logit > 0, logit, 0.2 * logit)  # LeakyReLU(0.2)
        logit = jnp.where(mask[None, :, :], logit, -1e30)

        m_prev = m_scr[...]
        m_new = jnp.maximum(m_prev, jnp.max(logit, axis=-1))          # [heads, Td]
        alpha = jnp.exp(m_prev - m_new)
        # keep this select: rows with no edges must not contribute exp(0)=1
        p = jnp.where(mask[None, :, :], jnp.exp(logit - m_new[:, :, None]), 0.0)
        # TODO(synk): GAT attention dropout (p=0.2) skipped (stochastic; inference).
        l_scr[...] = alpha * l_scr[...] + jnp.sum(p, axis=-1)
        m_scr[...] = m_new

        acc_scr[...] = (alpha[:, :, None] * acc_scr[...]
                        + jnp.einsum("htk,hkd->htd", p.astype(jnp.bfloat16),
                                     xs_ref[...],
                                     preferred_element_type=jnp.float32))

        @pl.when(k == nk - 1)
        def _fin():
            l = l_scr[...]
            inv = jnp.where(l > 0, 1.0 / l, 0.0)          # rows w/o edges -> bias only
            out_h = acc_scr[...] * inv[:, :, None]        # [heads, Td, dph]
            td = out_h.shape[1]
            out = jnp.transpose(out_h, (1, 0, 2)).reshape(td, hd)
            o_ref[...] = out + bias_ref[...]              # one full-width store
            # TODO(synk): fusing the downstream concat-Linear (obs/feat_gat_project,
            # repeat projection) into this finalize would remove a g write+read.

    return kernel


def sage_elu_kernel(adj_ref, xs_ref, xd_ref, wl_ref, bl_ref, wr_ref, o_ref,
                    agg_scr, deg_scr):
    """SAGEConv (mean aggregation) + F.elu, tiled over (dst, src) with an
    accumulator; both output matmuls accumulate into one f32 slab."""
    k = pl.program_id(1)

    @pl.when(k == 0)
    def _():
        agg_scr[...] = jnp.zeros_like(agg_scr)
        deg_scr[...] = jnp.zeros_like(deg_scr)

    a = adj_ref[...]                                      # bf16 counts
    deg_scr[...] += jnp.sum(a.astype(jnp.float32), axis=1, keepdims=True)
    agg_scr[...] += jnp.dot(a, xs_ref[...].astype(jnp.bfloat16),
                            preferred_element_type=jnp.float32)

    @pl.when(k == pl.num_programs(1) - 1)
    def _():
        deg = deg_scr[...]
        inv = jnp.where(deg > 0, 1.0 / deg, 0.0)
        aggm = agg_scr[...] * inv
        out = (jnp.dot(aggm.astype(jnp.bfloat16), wl_ref[...],
                       preferred_element_type=jnp.float32) + bl_ref[...]
               + jnp.dot(xd_ref[...].astype(jnp.bfloat16), wr_ref[...],
                         preferred_element_type=jnp.float32))
        # ELU(alpha=1)
        o_ref[...] = jnp.where(out > 0, out, jnp.exp(jnp.minimum(out, 0.0)) - 1.0)
    # TODO(synk): F.dropout after the SAGE layer skipped (inference kernel).


# ----------------------------------------------------------------------------
# Layer wrappers (glue)
# ----------------------------------------------------------------------------
def mlp_block(p, xs_list):
    """temp_layer: Linear -> BN(batch stats) -> [Dropout] -> Linear -> ReLU,
    with an arbitrary number of input slabs (split-weight fused concat)."""
    n = xs_list[0].shape[0]
    H = p["w2"].shape[1]
    cfg = _tpu_cfg()
    tn = _pick_tile(n, cfg["node_tile"], 16)
    num_tiles = n // tn
    grid = (num_tiles,)
    n_in = len(xs_list)

    w1 = p["w1"]
    w_chunks, off = [], 0
    for x in xs_list:
        d = x.shape[1]
        w_chunks.append(w1[off:off + d].astype(jnp.bfloat16))
        off += d

    in_specs = ([pl.BlockSpec((tn, x.shape[1]), lambda i: (i, 0)) for x in xs_list]
                + [pl.BlockSpec(w.shape, lambda i: (0, 0)) for w in w_chunks]
                + [pl.BlockSpec((1, H), lambda i: (0, 0))])

    h, s1, s2 = pl.pallas_call(
        make_lin_stats_kernel(n_in),
        grid=grid,
        in_specs=in_specs,
        out_specs=(pl.BlockSpec((tn, H), lambda i: (i, 0)),
                   pl.BlockSpec((1, H), lambda i: (i, 0)),
                   pl.BlockSpec((1, H), lambda i: (i, 0))),
        out_shape=(jax.ShapeDtypeStruct((n, H), jnp.bfloat16),
                   jax.ShapeDtypeStruct((num_tiles, H), jnp.float32),
                   jax.ShapeDtypeStruct((num_tiles, H), jnp.float32)),
        compiler_params=_cparams(("parallel",)),
    )(*xs_list, *w_chunks, p["b1"])

    out = pl.pallas_call(
        make_mlp_bn_kernel(n),
        grid=grid,
        in_specs=[pl.BlockSpec((tn, H), lambda i: (i, 0)),
                  pl.BlockSpec((num_tiles, H), lambda i: (0, 0)),
                  pl.BlockSpec((num_tiles, H), lambda i: (0, 0)),
                  pl.BlockSpec((1, H), lambda i: (0, 0)),
                  pl.BlockSpec((1, H), lambda i: (0, 0)),
                  pl.BlockSpec((H, H), lambda i: (0, 0)),
                  pl.BlockSpec((1, H), lambda i: (0, 0))],
        out_specs=pl.BlockSpec((tn, H), lambda i: (i, 0)),
        out_shape=jax.ShapeDtypeStruct((n, H), jnp.float32),
        compiler_params=_cparams(("parallel",)),
    )(h, s1, s2, p["gamma"], p["beta"], p["w2"].astype(jnp.bfloat16), p["b2"])
    return out


def gat_conv(p, x_src, x_dst, mv, transpose_mv=False):
    """Dense bipartite GATConv; mv is the sentinel-encoded bf16 mask/value slab.
    If transpose_mv, mv is stored (src, dst) and read with a transposed BlockSpec."""
    heads, dph = p["att_src"].shape
    hd = heads * dph
    ns, nd = x_src.shape[0], x_dst.shape[0]
    in_s, in_d = x_src.shape[1], x_dst.shape[1]
    cfg = _tpu_cfg()

    wlin_bf = p["w_lin"].astype(jnp.bfloat16)               # shared lin_src == lin_dst
    # lin_edge(v) = v * w_edge (bias=False)  =>  alpha_edge[h] = v * c1[h]
    c1 = jnp.einsum("hd,hd->h", p["w_edge"].reshape(heads, dph),
                    p["att_edge"]).reshape(heads, 1).astype(jnp.float32)
    bias = p["bias"].reshape(1, hd).astype(jnp.float32)

    ts_pre = _pick_tile(ns, cfg["node_tile"], 16)
    xt, asrc = pl.pallas_call(
        make_gat_src_kernel(heads, dph),
        grid=(ns // ts_pre,),
        in_specs=[pl.BlockSpec((ts_pre, in_s), lambda i: (i, 0)),
                  pl.BlockSpec((in_s, hd), lambda i: (0, 0)),
                  pl.BlockSpec((heads, dph), lambda i: (0, 0))],
        out_specs=(pl.BlockSpec((heads, ts_pre, dph), lambda i: (0, i, 0)),
                   pl.BlockSpec((heads, ts_pre), lambda i: (0, i))),
        out_shape=(jax.ShapeDtypeStruct((heads, ns, dph), jnp.bfloat16),
                   jax.ShapeDtypeStruct((heads, ns), jnp.float32)),
        compiler_params=_cparams(("parallel",)),
    )(x_src, wlin_bf, p["att_src"].astype(jnp.float32))

    td = _pick_tile(nd, cfg["node_tile"], 128)
    # size the src tile against the [heads, Td, Ts] in-kernel temporaries (~4 live f32)
    max_ts = max(128, ((cfg["attn_temp_budget"] // (heads * td * 4 * 4)) // 128) * 128)
    ts = _pick_tile(ns, min(cfg["src_tile"], max_ts), 128)

    if transpose_mv:
        mv_spec = pl.BlockSpec((ts, td), lambda i, k: (k, i))
    else:
        mv_spec = pl.BlockSpec((td, ts), lambda i, k: (i, k))

    out = pl.pallas_call(
        make_gat_attn_kernel(heads, dph, transpose_mv),
        grid=(nd // td, ns // ts),
        in_specs=[mv_spec,                                              # mv (bf16)
                  pl.BlockSpec((heads, ts, dph), lambda i, k: (0, k, 0)),  # xt
                  pl.BlockSpec((heads, ts), lambda i, k: (0, k)),        # asrc
                  pl.BlockSpec((td, in_d), lambda i, k: (i, 0)),         # x_dst
                  pl.BlockSpec((in_d, hd), lambda i, k: (0, 0)),         # w_lin (bf16)
                  pl.BlockSpec((heads, dph), lambda i, k: (0, 0)),       # att_dst
                  pl.BlockSpec((heads, 1), lambda i, k: (0, 0)),         # c1
                  pl.BlockSpec((1, hd), lambda i, k: (0, 0))],           # bias
        out_specs=pl.BlockSpec((td, hd), lambda i, k: (i, 0)),
        out_shape=jax.ShapeDtypeStruct((nd, hd), jnp.float32),
        scratch_shapes=[pltpu.VMEM((heads, td), jnp.float32),        # adst
                        pltpu.VMEM((heads, td), jnp.float32),        # running max
                        pltpu.VMEM((heads, td), jnp.float32),        # running sum
                        pltpu.VMEM((heads, td, dph), jnp.float32)],  # acc
        compiler_params=_cparams(("parallel", "arbitrary")),
    )(mv, xt, asrc, x_dst, wlin_bf, p["att_dst"].astype(jnp.float32), c1, bias)
    return out


def sage_conv_elu(p, x_src, x_dst, adj):
    nd, ns = adj.shape
    H = p["wl"].shape[1]
    cfg = _tpu_cfg()
    td = _pick_tile(nd, cfg["node_tile"], 16)
    ts = _pick_tile(ns, cfg["src_tile"], 128)
    return pl.pallas_call(
        sage_elu_kernel,
        grid=(nd // td, ns // ts),
        in_specs=[pl.BlockSpec((td, ts), lambda i, k: (i, k)),
                  pl.BlockSpec((ts, x_src.shape[1]), lambda i, k: (k, 0)),
                  pl.BlockSpec((td, x_dst.shape[1]), lambda i, k: (i, 0)),
                  pl.BlockSpec((x_src.shape[1], H), lambda i, k: (0, 0)),
                  pl.BlockSpec((1, H), lambda i, k: (0, 0)),
                  pl.BlockSpec((x_dst.shape[1], H), lambda i, k: (0, 0))],
        out_specs=pl.BlockSpec((td, H), lambda i, k: (i, 0)),
        out_shape=jax.ShapeDtypeStruct((nd, H), jnp.float32),
        scratch_shapes=[pltpu.VMEM((td, x_src.shape[1]), jnp.float32),
                        pltpu.VMEM((td, 1), jnp.float32)],
        compiler_params=_cparams(("parallel", "arbitrary")),
    )(adj, x_src, x_dst, p["wl"].astype(jnp.bfloat16), p["bl"],
      p["wr"].astype(jnp.bfloat16))


def linear2(w, b, x1, x2):
    n = x1.shape[0]
    H = w.shape[1]
    d1 = x1.shape[1]
    wa = w[:d1].astype(jnp.bfloat16)
    wb = w[d1:].astype(jnp.bfloat16)
    tn = _pick_tile(n, _tpu_cfg()["node_tile"], 16)
    return pl.pallas_call(
        lin2_kernel,
        grid=(n // tn,),
        in_specs=[pl.BlockSpec((tn, d1), lambda i: (i, 0)),
                  pl.BlockSpec((tn, x2.shape[1]), lambda i: (i, 0)),
                  pl.BlockSpec((d1, H), lambda i: (0, 0)),
                  pl.BlockSpec((x2.shape[1], H), lambda i: (0, 0)),
                  pl.BlockSpec((1, H), lambda i: (0, 0))],
        out_specs=pl.BlockSpec((tn, H), lambda i: (i, 0)),
        out_shape=jax.ShapeDtypeStruct((n, H), jnp.float32),
        compiler_params=_cparams(("parallel",)),
    )(x1, x2, wa, wb, b)


def project_y(p, x):
    n = x.shape[0]
    H = p["w1"].shape[1]
    C = p["w2"].shape[1]
    tn = _pick_tile(n, _tpu_cfg()["node_tile"], 16)
    num_tiles = n // tn
    grid = (num_tiles,)
    h, s1, s2 = pl.pallas_call(
        make_lin_stats_kernel(1),
        grid=grid,
        in_specs=[pl.BlockSpec((tn, x.shape[1]), lambda i: (i, 0)),
                  pl.BlockSpec((x.shape[1], H), lambda i: (0, 0)),
                  pl.BlockSpec((1, H), lambda i: (0, 0))],
        out_specs=(pl.BlockSpec((tn, H), lambda i: (i, 0)),
                   pl.BlockSpec((1, H), lambda i: (i, 0)),
                   pl.BlockSpec((1, H), lambda i: (i, 0))),
        out_shape=(jax.ShapeDtypeStruct((n, H), jnp.bfloat16),
                   jax.ShapeDtypeStruct((num_tiles, H), jnp.float32),
                   jax.ShapeDtypeStruct((num_tiles, H), jnp.float32)),
        compiler_params=_cparams(("parallel",)),
    )(x, p["w1"].astype(jnp.bfloat16), p["b1"])

    logits, logp = pl.pallas_call(
        make_projy_bn_kernel(n),
        grid=grid,
        in_specs=[pl.BlockSpec((tn, H), lambda i: (i, 0)),
                  pl.BlockSpec((num_tiles, H), lambda i: (0, 0)),
                  pl.BlockSpec((num_tiles, H), lambda i: (0, 0)),
                  pl.BlockSpec((H, C), lambda i: (0, 0)),
                  pl.BlockSpec((1, C), lambda i: (0, 0))],
        out_specs=(pl.BlockSpec((tn, C), lambda i: (i, 0)),
                   pl.BlockSpec((tn, C), lambda i: (i, 0))),
        out_shape=(jax.ShapeDtypeStruct((n, C), jnp.float32),
                   jax.ShapeDtypeStruct((n, C), jnp.float32)),
        compiler_params=_cparams(("parallel",)),
    )(h, s1, s2, p["w2"].astype(jnp.bfloat16), p["b2"])
    return logp, logits


# ----------------------------------------------------------------------------
# Full forward pass (num_layers=1 branch, fto_sample=False, otf_sample=False,
# task_type='node', categorical=False)
# ----------------------------------------------------------------------------
def fognn_forward(params, obs_features, feature_mask, feat_features, obs_adjs, data_x):
    # Single fused mask/value stream (bf16): masked-out entries carry a big-negative
    # sentinel. TODO(synk): assumes all real edge values are > -1e8.
    mv = jnp.where(feature_mask, data_x.astype(jnp.float32), -1e9).astype(jnp.bfloat16)

    obs = mlp_block(params["projects_obs0"], [obs_features])
    feat = mlp_block(params["projects_feat0"], [feat_features])

    # f -> o GAT over fto edges, then project concat(obs, gat_out) (split-weight fused)
    g = gat_conv(params["gat_fto0"], feat, obs, mv)
    obs = mlp_block(params["obs_gat_project0"], [obs, g])

    # obs-obs SAGE layer(s)
    size1 = obs.shape[0]
    for i, (edge_index, _e_id, size) in enumerate(obs_adjs):
        obs = mlp_block(params["projects"][i], [obs])
        size1 = size[1]
        obs_target = obs[:size1]
        # TODO(synk): dense adjacency; a CSR scalar-prefetch gather kernel would
        # avoid the O(N^2) HBM stream for large sparse obs-obs graphs.
        adj = (jnp.zeros((size1, obs.shape[0]), jnp.float32)
               .at[edge_index[1], edge_index[0]].add(1.0)).astype(jnp.bfloat16)
        obs = sage_conv_elu(params["gin_convs"][i], obs, obs_target, adj)

    # restrict otf/fto edges to the first size1 observation rows
    mv = mv[:size1]

    # o -> f GAT over otf edges (transposed read of mv, no materialized mv.T)
    g = gat_conv(params["gat_otf0"], obs, feat, mv, transpose_mv=True)
    feat = mlp_block(params["feat_gat_project0"], [feat, g])

    # repeated f -> o GAT + plain linear projection over concat(obs, gat_out)
    g = gat_conv(params["gat_fto_rep"], feat, obs, mv)
    obs = linear2(params["rep_w"], params["rep_b"], obs, g)

    # project_Y + log_softmax
    logp, logits = project_y(params["projectY"], obs)
    return logp, logits, feat


# ----------------------------------------------------------------------------
# Deterministic parameter init (shapes per module __init__; synthetic values)
# ----------------------------------------------------------------------------
def init_params(key, obs_in, feat_in, hidden, heads, out_channels):
    keys = iter(jax.random.split(key, 64))

    def dense(shape, scale=0.1):
        return (scale * jax.random.normal(next(keys), shape)).astype(jnp.float32)

    def mlp(i, o):
        return dict(
            w1=dense((i, o)), b1=dense((1, o)),
            gamma=jnp.ones((1, o), jnp.float32), beta=jnp.zeros((1, o), jnp.float32),
            w2=dense((o, o)), b2=dense((1, o)),
        )

    def gat(i):
        dph = hidden // heads
        return dict(
            w_lin=dense((i, heads * dph)),
            att_src=dense((heads, dph)), att_dst=dense((heads, dph)),
            att_edge=dense((heads, dph)), w_edge=dense((heads * dph,)),
            bias=dense((heads * dph,)),
        )

    def sage():
        return dict(wl=dense((hidden, hidden)), bl=dense((1, hidden)),
                    wr=dense((hidden, hidden)))

    return dict(
        projects_obs0=mlp(obs_in, hidden),
        projects_feat0=mlp(feat_in, hidden),
        projects=[mlp(hidden, hidden), mlp(hidden, hidden)],
        obs_gat_project0=mlp(2 * hidden, hidden),
        feat_gat_project0=mlp(2 * hidden, hidden),
        gat_fto0=gat(hidden),
        gat_otf0=gat(hidden),
        gat_fto_rep=gat(hidden),
        gin_convs=[sage(), sage()],
        rep_w=dense((2 * hidden, hidden)),
        rep_b=dense((1, hidden)),
        projectY=dict(w1=dense((hidden, hidden)), b1=dense((1, hidden)),
                      w2=dense((hidden, out_channels)), b2=dense((1, out_channels))),
    )


# ----------------------------------------------------------------------------
# Driver
# ----------------------------------------------------------------------------
if __name__ == "__main__":
    key = jax.random.PRNGKey(0)
    k_data, k_param, k_edge = jax.random.split(key, 3)

    N_OBS, N_FEAT = 16, 8          # observation nodes, feature nodes (= #columns of data_x)
    OBS_IN = 8                     # num_obs_node_features
    HID, HEADS, OUT_C = 32, 4, 4   # hidden_size, heads, out_channels

    kk = jax.random.split(k_data, 3)
    obs_features = jax.random.normal(kk[0], (N_OBS, OBS_IN), jnp.float32)
    feat_features = jax.random.normal(kk[1], (N_FEAT, N_FEAT), jnp.float32)
    data_x = jax.random.uniform(kk[2], (N_OBS, N_FEAT), jnp.float32)
    feature_mask = data_x > 0.4    # create_otf_edges: edges where mask, attr = data_x value

    # obs-obs neighborhood graph (single hop, no sampling -> size = (N_OBS, N_OBS))
    ke = jax.random.split(k_edge, 2)
    n_edges = 48
    src = jax.random.randint(ke[0], (n_edges,), 0, N_OBS)
    dst = jax.random.randint(ke[1], (n_edges,), 0, N_OBS)
    obs_edge_index = jnp.stack([src, dst]).astype(jnp.int32)
    obs_adjs = [(obs_edge_index, None, (N_OBS, N_OBS))]

    params = init_params(k_param, OBS_IN, N_FEAT, HID, HEADS, OUT_C)

    out, obs_logits, feat_out = fognn_forward(
        params, obs_features, feature_mask, feat_features, obs_adjs, data_x
    )
    jax.block_until_ready((out, obs_logits, feat_out))

    assert out.shape == (N_OBS, OUT_C)
    assert obs_logits.shape == (N_OBS, OUT_C)
    assert feat_out.shape == (N_FEAT, HID)
    print("KERNEL_OK")
</pallas_src>

<mosaic_0001>
module attributes {stable_mosaic.version = 11 : i64} {
  func.func @kernel(%arg0: i32, %arg1: memref<16x8xf32, #tpu.memory_space<vmem>>, %arg2: memref<8x32xbf16, #tpu.memory_space<vmem>>, %arg3: memref<1x32xf32, #tpu.memory_space<vmem>>, %arg4: memref<16x32xbf16, #tpu.memory_space<vmem>>, %arg5: memref<1x32xf32, #tpu.memory_space<vmem>>, %arg6: memref<1x32xf32, #tpu.memory_space<vmem>>) attributes {dimension_semantics = [#tpu.dimension_semantics<parallel>], iteration_bounds = array<i64: 1>, scalar_prefetch = 0 : i64, scratch_operands = 0 : i64, tpu.core_type = #tpu.core_type<tc>, window_params = [{transform_indices = @transform_0, window_bounds = array<i64: 16, 8>}, {pipeline_mode = #tpu.pipeline_mode<synchronous>, transform_indices = @transform_1, window_bounds = array<i64: 8, 32>}, {pipeline_mode = #tpu.pipeline_mode<synchronous>, transform_indices = @transform_2, window_bounds = array<i64: 1, 32>}, {transform_indices = @transform_3, window_bounds = array<i64: 16, 32>}, {transform_indices = @transform_4, window_bounds = array<i64: 1, 32>}, {transform_indices = @transform_5, window_bounds = array<i64: 1, 32>}]} {
    %c0 = arith.constant 0 : index
    %c0_0 = arith.constant 0 : index
    %0 = vector.load %arg1[%c0, %c0_0] : memref<16x8xf32, #tpu.memory_space<vmem>>, vector<16x8xf32>
    %1 = arith.truncf %0 : vector<16x8xf32> to vector<16x8xbf16>
    %c0_1 = arith.constant 0 : index
    %c0_2 = arith.constant 0 : index
    %2 = vector.load %arg2[%c0_1, %c0_2] : memref<8x32xbf16, #tpu.memory_space<vmem>>, vector<8x32xbf16>
    %cst = arith.constant dense<0.000000e+00> : vector<16x32xf32>
    %3 = tpu.matmul %1, %2, %cst {dimension_numbers = #tpu.dot_dimension_numbers<[1], [0], [0], [1], [0, 0, 1, 1], [], []>} : vector<16x8xbf16>, vector<8x32xbf16>, vector<16x32xf32> -> vector<16x32xf32>
    %c0_3 = arith.constant 0 : index
    %c0_4 = arith.constant 0 : index
    %4 = vector.load %arg3[%c0_3, %c0_4] : memref<1x32xf32, #tpu.memory_space<vmem>>, vector<1x32xf32>
    %5 = vector.broadcast %4 : vector<1x32xf32> to vector<16x32xf32>
    %6 = arith.addf %3, %5 : vector<16x32xf32>
    %7 = arith.truncf %6 : vector<16x32xf32> to vector<16x32xbf16>
    %c0_5 = arith.constant 0 : index
    %c0_6 = arith.constant 0 : index
    %8 = vector.load %arg4[%c0_5, %c0_6] : memref<16x32xbf16, #tpu.memory_space<vmem>>, vector<16x32xbf16>
    tpu.vector_store %arg4[%c0_5, %c0_6], %7 {strides = array<i32>} : memref<16x32xbf16, #tpu.memory_space<vmem>>, vector<16x32xbf16>,
    %cst_7 = arith.constant dense<0.000000e+00> : vector<32xf32>
    %9 = vector.multi_reduction <add>, %6, %cst_7 [0] : vector<16x32xf32> to vector<32xf32>
    %10 = vector.shape_cast %9 : vector<32xf32> to vector<1x32xf32>
    %c0_8 = arith.constant 0 : index
    %c0_9 = arith.constant 0 : index
    %11 = vector.load %arg5[%c0_8, %c0_9] : memref<1x32xf32, #tpu.memory_space<vmem>>, vector<1x32xf32>
    tpu.vector_store %arg5[%c0_8, %c0_9], %10 {strides = array<i32>} : memref<1x32xf32, #tpu.memory_space<vmem>>, vector<1x32xf32>,
    %12 = arith.mulf %6, %6 : vector<16x32xf32>
    %cst_10 = arith.constant dense<0.000000e+00> : vector<32xf32>
    %13 = vector.multi_reduction <add>, %12, %cst_10 [0] : vector<16x32xf32> to vector<32xf32>
    %14 = vector.shape_cast %13 : vector<32xf32> to vector<1x32xf32>
    %c0_11 = arith.constant 0 : index
    %c0_12 = arith.constant 0 : index
    %15 = vector.load %arg6[%c0_11, %c0_12] : memref<1x32xf32, #tpu.memory_space<vmem>>, vector<1x32xf32>
    tpu.vector_store %arg6[%c0_11, %c0_12], %14 {strides = array<i32>} : memref<1x32xf32, #tpu.memory_space<vmem>>, vector<1x32xf32>,
    return
  }
  func.func @transform_0(%arg0: i32) -> (i32, i32) {
    %c0_i32 = arith.constant 0 : i32
    %c0_i32_0 = arith.constant 0 : i32
    return %arg0, %c0_i32 : i32, i32
  }
  func.func @transform_1(%arg0: i32) -> (i32, i32) {
    %c0_i32 = arith.constant 0 : i32
    %c0_i32_0 = arith.constant 0 : i32
    %c0_i32_1 = arith.constant 0 : i32
    return %c0_i32, %c0_i32_0 : i32, i32
  }
  func.func @transform_2(%arg0: i32) -> (i32, i32) {
    %c0_i32 = arith.constant 0 : i32
    %c0_i32_0 = arith.constant 0 : i32
    %c0_i32_1 = arith.constant 0 : i32
    return %c0_i32, %c0_i32_0 : i32, i32
  }
  func.func @transform_3(%arg0: i32) -> (i32, i32) {
    %c0_i32 = arith.constant 0 : i32
    %c0_i32_0 = arith.constant 0 : i32
    return %arg0, %c0_i32 : i32, i32
  }
  func.func @transform_4(%arg0: i32) -> (i32, i32) {
    %c0_i32 = arith.constant 0 : i32
    %c0_i32_0 = arith.constant 0 : i32
    return %arg0, %c0_i32 : i32, i32
  }
  func.func @transform_5(%arg0: i32) -> (i32, i32) {
    %c0_i32 = arith.constant 0 : i32
    %c0_i32_0 = arith.constant 0 : i32
    return %arg0, %c0_i32 : i32, i32
  }
}

</mosaic_0001>

<llo_original>
// kernel: tpu_custom_call.1
$region0: #{tpu_custom_call.1}
  #allocation0 [shape = 'u32[]', space=smem, size = 0x4, offset = 0x4, fixed_abs, tag = 'smem constant byte address 0x4 - core index']
  #allocation1 [shape = 'u32[72,128]{1,0:T(1,128)}', space=vmem, size = 0x9000, scoped, tag = 'internal scratch']
  %s0 = inlined_call_operand.vmem [shape: f32[16,8], index: 0, kind: input, shape index: {}]
  %s1 = inlined_call_operand.vmem [shape: bf16[8,32], index: 1, kind: input, shape index: {}]
  %s2 = inlined_call_operand.vmem [shape: f32[1,32], index: 2, kind: input, shape index: {}]
  %s3 = inlined_call_operand.hbm [shape: bf16[16,32], index: 3, kind: output, shape index: {0}]
  %s4 = inlined_call_operand.hbm [shape: f32[1,32], index: 4, kind: output, shape index: {1}]
  %s5 = inlined_call_operand.hbm [shape: f32[1,32], index: 5, kind: output, shape index: {2}]
  %6 = xla_tuple %s3, %s4, %s5
  %s7 = sld [smem:[#allocation0]]
  $region38: #{tpu_custom_call.1} parent=0
    _
  %s9 = ssub.s32 1, %s7
  %s10 = scalar_select 0, %s9, %s7
  $region1: #{tpu_custom_call.1} parent=0
    #allocation2 [shape = 'u8[4096]{0}', space=vmem, size = 0x1000, scoped, tag = 'output window, operand 0, single buffered']
    #allocation3 [shape = 's32[1]{0}', space=sflag, size = 0x4, scoped, tag = 'scoped memory for tpu_custom_call.1']
    #allocation4 [shape = 'u8[512]{0}', space=vmem, size = 0x400, scoped, tag = 'output window, operand 1, single buffered']
    #allocation5 [shape = 's32[1]{0}', space=sflag, size = 0x4, scoped, tag = 'scoped memory for tpu_custom_call.1']
    #allocation6 [shape = 'u8[512]{0}', space=vmem, size = 0x400, scoped, tag = 'output window, operand 2, single buffered']
    %11 = vsyncpa [#allocation3], 0
    %12 = vsyncpa [#allocation5], 0
    // Predicated region
    $region2: #{tpu_custom_call.1} parent=1 // pred_check
      _
    $region3: #{tpu_custom_call.1} parent=1 // pred_check_branch
      %14 = sbr.rel (0) target = $region5
    $region4: #{tpu_custom_call.1} parent=1 // pred_region
      _
    $region5: #{tpu_custom_call.1} parent=1 // pred_fallthru
      _
    // Predicated region
    $region6: #{tpu_custom_call.1} parent=1 // pred_check
      _
    $region7: #{tpu_custom_call.1} parent=1 // pred_check_branch
      %16 = sbr.rel (0) target = $region9
    $region8: #{tpu_custom_call.1} parent=1 // pred_region
      _
    $region9: #{tpu_custom_call.1} parent=1 // pred_fallthru
      _
    // Predicated region
    $region10: #{tpu_custom_call.1} parent=1 // pred_check
      _
    $region11: #{tpu_custom_call.1} parent=1 // pred_check_branch
      %18 = sbr.rel (0) target = $region13
    $region12: #{tpu_custom_call.1} parent=1 // pred_region
      _
    $region13: #{tpu_custom_call.1} parent=1 // pred_fallthru
      _
    %v20 = vld [vmem:[%s0] sm:$0xff]
    %v21 = vld [vmem:[%s0 + $0x8] sm:$0xff]
    %v22 = vpack.c.bf16 %v21, %v20
    %v23 = vld [vmem:[%s1] sm:$0xf]
    %v24 = vld [vmem:[%s2] sm:$0x1]
    %v26 = vperm.slane %v24, 0
    %vm28 = vcmask 64512
    %v30 = vsel %vm28, %v22, 0
    %vm32 = vcmask 1043456
    %v34 = vsel %vm32, %v23, 0
    %36 = vmatpush.bf16.msra.mxu0 0
    %37 = vmatpush.bf16.msra.mxu0 0
    %38 = vmatpush.bf16.msra.mxu0 0
    %39 = vmatpush.bf16.msra.mxu0 0
    %40 = vmatpush.bf16.msra.mxu0 0
    %41 = vmatpush.bf16.msra.mxu0 0
    %42 = vmatpush.bf16.msra.mxu0 0
    %43 = vmatpush.bf16.msra.mxu0 %v34
    %44 = vmatmul.bf16.gmra.mxu0 %v30
    %v45 = vpop.f32.mrf.mxu0
    %v46 = vadd.f32 %v26, %v45
    %v47 = vpop.f32.mrf.mxu0
    %v48 = vadd.f32 %v26, %v47
    %49 = vdwg.mxu0
    %v50 = vpack.c.bf16 %v46, %v46
    %v51 = vpack.c.bf16 %v48, %v48
    %vm52 = vcmask 257024
    %53 = vst.msk [vmem:[#allocation2] sm:$0xf] %vm52, %v50
    %54 = vst.msk [vmem:[#allocation2 + $0x4] sm:$0xf] %vm52, %v51
    %vm55 = vcmask 261120
    %v56 = vsel %vm55, %v46, 0.0
    %v57 = vsel %vm55, %v48, 0.0
    %v58 = vadd.f32 %v56, %v57
    %v59 = vrot.slane %v58, 4
    %v60 = vadd.f32 %v58, %v59
    %v61 = vrot.slane %v60, 2
    %v62 = vadd.f32 %v60, %v61
    %v63 = vrot.slane %v62, 1
    %v64 = vadd.f32 %v62, %v63
    %vm65 = vcmask 253952
    %66 = vst.msk [vmem:[#allocation4] sm:$0x1] %vm65, %v64
    %v67 = vmul.f32 %v46, %v46
    %v68 = vmul.f32 %v48, %v48
    %v69 = vsel %vm55, %v67, 0.0
    %v70 = vsel %vm55, %v68, 0.0
    %v71 = vadd.f32 %v69, %v70
    %v72 = vrot.slane %v71, 4
    %v73 = vadd.f32 %v71, %v72
    %v74 = vrot.slane %v73, 2
    %v75 = vadd.f32 %v73, %v74
    %v76 = vrot.slane %v75, 1
    %v77 = vadd.f32 %v75, %v76
    %78 = vst.msk [vmem:[#allocation6] sm:$0x1] %vm65, %v77
    // Predicated region
    $region14: #{tpu_custom_call.1} parent=1 // pred_check
      _
    $region15: #{tpu_custom_call.1} parent=1 // pred_check_branch
      %80 = sbr.rel (0) target = $region17
    $region16: #{tpu_custom_call.1} parent=1 // pred_region
      %82 = vsyncadd [#allocation3], 0
      %s83 = sshll.u32 [#allocation2], 4
      %s84 = int_to_ptr.vmem [resolvable:$true] %s83
      %s85 = sshll.u32 %s3, 4
      %s86 = int_to_ptr.hbm [resolvable:$true] %s85
      %91 = dma.vmem_to_hbm [thread:$0]  %s84, 128, %s86, [#allocation3], 64, 64, 4
    $region17: #{tpu_custom_call.1} parent=1 // pred_fallthru
      _
    // Predicated region
    $region18: #{tpu_custom_call.1} parent=1 // pred_check
      _
    $region19: #{tpu_custom_call.1} parent=1 // pred_check_branch
      %93 = sbr.rel (0) target = $region21
    $region20: #{tpu_custom_call.1} parent=1 // pred_region
      %95 = vsyncadd [#allocation5], 0
      %s97 = sshll.u32 [#allocation4], 4
      %s98 = int_to_ptr.vmem [resolvable:$true] %s97
      %s99 = sshll.u32 %s4, 4
      %s100 = int_to_ptr.hbm [resolvable:$true] %s99
      %102 = dma.vmem_to_hbm [thread:$0]  %s98, 16, %s100, [#allocation5]
    $region21: #{tpu_custom_call.1} parent=1 // pred_fallthru
      _
    // Predicated region
    $region22: #{tpu_custom_call.1} parent=1 // pred_check
      _
    $region23: #{tpu_custom_call.1} parent=1 // pred_check_branch
      %104 = sbr.rel (0) target = $region25
    $region24: #{tpu_custom_call.1} parent=1 // pred_region
      %106 = vsyncadd [#allocation5], 0
      %s108 = sshll.u32 [#allocation6], 4
      %s109 = int_to_ptr.vmem [resolvable:$true] %s108
      %s110 = sshll.u32 %s5, 4
      %s111 = int_to_ptr.hbm [resolvable:$true] %s110
      %113 = dma.vmem_to_hbm [thread:$0]  %s109, 16, %s111, [#allocation5]
    $region25: #{tpu_custom_call.1} parent=1 // pred_fallthru
      _
    // Predicated region
    $region26: #{tpu_custom_call.1} parent=1 // pred_check
      _
    $region27: #{tpu_custom_call.1} parent=1 // pred_check_branch
      %115 = sbr.rel (0) target = $region29
    $region28: #{tpu_custom_call.1} parent=1 // pred_region
      %117 = dma.done [#allocation3], 128
    $region29: #{tpu_custom_call.1} parent=1 // pred_fallthru
      _
    // Predicated region
    $region30: #{tpu_custom_call.1} parent=1 // pred_check
      _
    $region31: #{tpu_custom_call.1} parent=1 // pred_check_branch
      %119 = sbr.rel (0) target = $region33
    $region32: #{tpu_custom_call.1} parent=1 // pred_region
      %121 = dma.done [#allocation5], 16
    $region33: #{tpu_custom_call.1} parent=1 // pred_fallthru
      _
    // Predicated region
    $region34: #{tpu_custom_call.1} parent=1 // pred_check
      _
    $region35: #{tpu_custom_call.1} parent=1 // pred_check_branch
      %123 = sbr.rel (0) target = $region37
    $region36: #{tpu_custom_call.1} parent=1 // pred_region
      %125 = dma.done [#allocation5], 16
    $region37: #{tpu_custom_call.1} parent=1 // pred_fallthru
      _
    %126 = vsyncpa [#allocation3], 1
    %127 = vsyncpa [#allocation5], 1

</llo_original>
